<compile_context>
chip_gen: v7x
topology: tpu7x:2x2x1
jax: 0.10.0
libtpu: 0.0.40
codegen_flags: <defaults>
</compile_context>

<pallas_src>
import jax
import jax.numpy as jnp
from jax.experimental import pallas as pl
from jax.experimental.pallas import tpu as pltpu  # noqa: F401  (TPU params if scaled up)

LANE = 128


def _mlp_kernel(xt_ref, p_ref, out_ref):
    # Single packed-param load: (H, 128) f32 slab (4 vregs for H=32).
    p = p_ref[...]
    w1t = p[:, 0:1]          # (H, 1)  == w1^T
    b1t = p[:, 1:2]          # (H, 1)  == b1^T
    w2 = p[:, 2:3]           # (H, 1)
    b2 = p[0:1, 3:4]         # (1, 1)

    # Layer 1: outer-product via VPU broadcast multiply (no MXU round-trip).
    xt = xt_ref[...]                                   # (1, Bp)  batch on lanes
    h = jnp.maximum(w1t * xt + b1t, 0.0)               # (H, Bp)  fused mul+add+relu

    # Layer 2: VPU multiply + sublane (XLU) reduction instead of a K=32,N=1 matmul.
    y = jnp.sum(h * w2, axis=0, keepdims=True) + b2    # (1, Bp)

    # Lane-dense store: output last dim is Bp (multiple of 128) -> unmasked vst.
    out_ref[...] = y.astype(out_ref.dtype)


def pack_params(w1, b1, w2, b2):
    """One-time packing: w1 (1,H), b1 (1,H), w2 (H,1), b2 (1,1) -> (H, 128) slab."""
    H = w1.shape[1]
    p = jnp.zeros((H, LANE), jnp.float32)
    p = p.at[:, 0].set(w1[0, :].astype(jnp.float32))   # col 0: w1^T
    p = p.at[:, 1].set(b1[0, :].astype(jnp.float32))   # col 1: b1^T
    p = p.at[:, 2].set(w2[:, 0].astype(jnp.float32))   # col 2: w2
    p = p.at[0, 3].set(b2[0, 0].astype(jnp.float32))   # [0,3]: b2 scalar
    return p


def net_forward_lanes(xt, packed):
    """Fused MLP forward in batch-on-lanes layout.

    xt:     (1, Bp) f32, batch on lanes, zero-padded past the real batch.
    packed: (H, 128) f32 param slab from pack_params().
    Returns (1, Bp) f32 (lane-dense).  Lanes >= real batch hold garbage
    (relu(b1)*w2 + b2); the caller must slice [:B] before consuming.
    """
    Bp = xt.shape[1]
    H, W = packed.shape
    return pl.pallas_call(
        _mlp_kernel,
        out_shape=jax.ShapeDtypeStruct((1, Bp), jnp.float32),
        in_specs=[
            pl.BlockSpec((1, Bp), lambda: (0, 0)),   # x^T, lane-dense
            pl.BlockSpec((H, W), lambda: (0, 0)),    # packed params, single DMA
        ],
        out_specs=pl.BlockSpec((1, Bp), lambda: (0, 0)),
    )(xt, packed)


# Jit the whole forward so the (tiny) surrounding XLA work fuses with dispatch.
net_forward_lanes_jit = jax.jit(net_forward_lanes)


def init_params(key, n_features, n_hidden, n_output):
    # Deterministic init mimicking torch.nn.Linear's U(-1/sqrt(fan_in), 1/sqrt(fan_in)).
    k1, k2, k3, k4 = jax.random.split(key, 4)
    lim1 = 1.0 / jnp.sqrt(jnp.float32(n_features))
    lim2 = 1.0 / jnp.sqrt(jnp.float32(n_hidden))
    w1 = jax.random.uniform(k1, (n_features, n_hidden), jnp.float32, -lim1, lim1)
    b1 = jax.random.uniform(k2, (1, n_hidden), jnp.float32, -lim1, lim1)
    w2 = jax.random.uniform(k3, (n_hidden, n_output), jnp.float32, -lim2, lim2)
    b2 = jax.random.uniform(k4, (1, n_output), jnp.float32, -lim2, lim2)
    return w1, b1, w2, b2


if __name__ == "__main__":
    # Matches the exercise: x = unsqueeze(linspace(-1, 1, 100), dim=1) -> (100, 1)
    n_features, n_hidden, n_output = 1, 32, 1
    batch = 100
    Bp = ((batch + LANE - 1) // LANE) * LANE    # 100 -> 128

    w1, b1, w2, b2 = init_params(jax.random.PRNGKey(0), n_features, n_hidden, n_output)

    # One-time, init-side work (hoisted out of the per-call path):
    packed = pack_params(w1, b1, w2, b2)                     # (32, 128) slab
    x_vals = jnp.linspace(-1.0, 1.0, batch, dtype=jnp.float32)
    xt = jnp.zeros((1, Bp), jnp.float32).at[0, :batch].set(x_vals)  # batch-on-lanes

    # Forward: stays lane-dense (1, Bp) end-to-end.
    yt = net_forward_lanes_jit(xt, packed)
    jax.block_until_ready(yt)

    # Final consumer only: slice padded lanes and compare in torch layout (B, 1).
    x = x_vals[:, None]                                      # (100, 1)
    h_ref = jnp.maximum(x @ w1 + b1, 0.0)
    y_ref = h_ref @ w2 + b2
    y = yt[0, :batch][:, None]
    assert y.shape == (batch, n_output)
    assert jnp.allclose(y, y_ref, atol=1e-5, rtol=1e-5)

    print("KERNEL_OK")
</pallas_src>

<mosaic_0001>
module attributes {stable_mosaic.version = 11 : i64} {
  func.func @_mlp_kernel(%arg0: memref<1x128xf32, #tpu.memory_space<vmem>>, %arg1: memref<32x128xf32, #tpu.memory_space<vmem>>, %arg2: memref<1x128xf32, #tpu.memory_space<vmem>>) attributes {dimension_semantics = [], scalar_prefetch = 0 : i64, scratch_operands = 0 : i64, tpu.core_type = #tpu.core_type<tc>} {
    %c0 = arith.constant 0 : index
    %c0_0 = arith.constant 0 : index
    %0 = vector.load %arg1[%c0, %c0_0] : memref<32x128xf32, #tpu.memory_space<vmem>>, vector<32x128xf32>
    %1 = vector.extract_strided_slice %0 {offsets = [0, 0], sizes = [32, 1], strides = [1, 1]} : vector<32x128xf32> to vector<32x1xf32>
    %2 = vector.extract_strided_slice %0 {offsets = [0, 1], sizes = [32, 1], strides = [1, 1]} : vector<32x128xf32> to vector<32x1xf32>
    %3 = vector.extract_strided_slice %0 {offsets = [0, 2], sizes = [32, 1], strides = [1, 1]} : vector<32x128xf32> to vector<32x1xf32>
    %4 = vector.extract_strided_slice %0 {offsets = [0, 3], sizes = [1, 1], strides = [1, 1]} : vector<32x128xf32> to vector<1x1xf32>
    %c0_1 = arith.constant 0 : index
    %c0_2 = arith.constant 0 : index
    %5 = vector.load %arg0[%c0_1, %c0_2] : memref<1x128xf32, #tpu.memory_space<vmem>>, vector<1x128xf32>
    %6 = vector.broadcast %1 : vector<32x1xf32> to vector<32x128xf32>
    %7 = vector.broadcast %5 : vector<1x128xf32> to vector<32x128xf32>
    %8 = arith.mulf %6, %7 : vector<32x128xf32>
    %9 = vector.broadcast %2 : vector<32x1xf32> to vector<32x128xf32>
    %10 = arith.addf %8, %9 : vector<32x128xf32>
    %cst = arith.constant 0.000000e+00 : f32
    %11 = vector.broadcast %cst : f32 to vector<32x128xf32>
    %12 = arith.maximumf %10, %11 : vector<32x128xf32>
    %13 = vector.broadcast %3 : vector<32x1xf32> to vector<32x128xf32>
    %14 = arith.mulf %12, %13 : vector<32x128xf32>
    %cst_3 = arith.constant dense<0.000000e+00> : vector<128xf32>
    %15 = vector.multi_reduction <add>, %14, %cst_3 [0] : vector<32x128xf32> to vector<128xf32>
    %16 = vector.shape_cast %15 : vector<128xf32> to vector<1x128xf32>
    %17 = vector.broadcast %4 : vector<1x1xf32> to vector<1x128xf32>
    %18 = arith.addf %16, %17 : vector<1x128xf32>
    %c0_4 = arith.constant 0 : index
    %c0_5 = arith.constant 0 : index
    %19 = vector.load %arg2[%c0_4, %c0_5] : memref<1x128xf32, #tpu.memory_space<vmem>>, vector<1x128xf32>
    tpu.vector_store %arg2[%c0_4, %c0_5], %18 {strides = array<i32>} : memref<1x128xf32, #tpu.memory_space<vmem>>, vector<1x128xf32>,
    return
  }
}

</mosaic_0001>

<llo_original>
// kernel: net_forward_lanes.1
$region0: #{net_forward_lanes.1}
  #allocation0 [shape = 'u32[]', space=smem, size = 0x4, offset = 0x4, fixed_abs, tag = 'smem constant byte address 0x4 - core index']
  #allocation1 [shape = 'u32[144,128]{1,0:T(1,128)}', space=vmem, size = 0x12000, scoped, tag = 'internal scratch']
  %s0 = inlined_call_operand.hbm [shape: f32[1,128], index: 0, kind: input, shape index: {}]
  %s1 = inlined_call_operand.hbm [shape: f32[32,128], index: 1, kind: input, shape index: {}]
  %s2 = inlined_call_operand.hbm [shape: f32[1,128], index: 2, kind: output, shape index: {}]
  %s3 = sld [smem:[#allocation0]]
  $region26: #{net_forward_lanes.1} parent=0
    _
  %s5 = ssub.s32 1, %s3
  %s6 = scalar_select 0, %s5, %s3
  $region1: #{net_forward_lanes.1} parent=0
    #allocation2 [shape = 'u8[512]{0}', space=vmem, size = 0x400, scoped, tag = 'input window, operand 0, single buffered']
    #allocation3 [shape = 's32[1]{0}', space=sflag, size = 0x4, scoped, tag = 'scoped memory for net_forward_lanes.1']
    #allocation4 [shape = 's32[1]{0}', space=sflag, size = 0x4, scoped, tag = 'scoped memory for net_forward_lanes.1']
    #allocation5 [shape = 'u8[16384]{0}', space=vmem, size = 0x4000, scoped, tag = 'input window, operand 1, single buffered']
    #allocation6 [shape = 's32[1]{0}', space=sflag, size = 0x4, scoped, tag = 'scoped memory for net_forward_lanes.1']
    #allocation7 [shape = 'u8[512]{0}', space=vmem, size = 0x400, scoped, tag = 'output window, operand 0, single buffered']
    %7 = vsyncpa [#allocation3], 0
    %8 = vsyncpa [#allocation6], 0
    %9 = vsyncpa [#allocation4], 0
    // Predicated region
    $region2: #{net_forward_lanes.1} parent=1 // pred_check
      _
    $region3: #{net_forward_lanes.1} parent=1 // pred_check_branch
      %11 = sbr.rel (0) target = $region5
    $region4: #{net_forward_lanes.1} parent=1 // pred_region
      %s13 = ssub.s32 16, 16
      %14 = vsyncadd [#allocation3], %s13
      %s16 = sshll.u32 [#allocation2], 4
      %s17 = int_to_ptr.vmem [resolvable:$true] %s16
      %19 = dma.hbm_to_vmem [thread:$0]  %s0, 16, %s17, [#allocation3]
    $region5: #{net_forward_lanes.1} parent=1 // pred_fallthru
      _
    // Predicated region
    $region6: #{net_forward_lanes.1} parent=1 // pred_check
      _
    $region7: #{net_forward_lanes.1} parent=1 // pred_check_branch
      %21 = sbr.rel (0) target = $region9
    $region8: #{net_forward_lanes.1} parent=1 // pred_region
      %s23 = ssub.s32 512, 512
      %24 = vsyncadd [#allocation6], %s23
      %s25 = sshll.u32 [#allocation5], 4
      %s26 = int_to_ptr.vmem [resolvable:$true] %s25
      %31 = dma.hbm_to_vmem [thread:$0]  %s1, 512, %s26, [#allocation6], 128, 128, 8
    $region9: #{net_forward_lanes.1} parent=1 // pred_fallthru
      _
    // Predicated region
    $region10: #{net_forward_lanes.1} parent=1 // pred_check
      _
    $region11: #{net_forward_lanes.1} parent=1 // pred_check_branch
      %33 = sbr.rel (0) target = $region13
    $region12: #{net_forward_lanes.1} parent=1 // pred_region
      %34 = dma.done [#allocation3], 16
    $region13: #{net_forward_lanes.1} parent=1 // pred_fallthru
      _
    // Predicated region
    $region14: #{net_forward_lanes.1} parent=1 // pred_check
      _
    $region15: #{net_forward_lanes.1} parent=1 // pred_check_branch
      %36 = sbr.rel (0) target = $region17
    $region16: #{net_forward_lanes.1} parent=1 // pred_region
      %37 = dma.done [#allocation6], 512
    $region17: #{net_forward_lanes.1} parent=1 // pred_fallthru
      _
    %v38 = vld [vmem:[#allocation5] sm:$0xff]
    %v39 = vld [vmem:[#allocation5 + $0x8] sm:$0xff]
    %v40 = vld [vmem:[#allocation5 + $0x10] sm:$0xff]
    %v41 = vld [vmem:[#allocation5 + $0x18] sm:$0xff]
    %v42 = vld [vmem:[#allocation2] sm:$0x1]
    %44 = vset.pattern.permute.xlu0 0
    %45 = vperm.xlu0 %44, %v38
    %v46 = vpop.permute.xlu0 %45
    %49 = vset.pattern.permute.xlu0 0
    %50 = vperm.xlu0 %49, %v39
    %v51 = vpop.permute.xlu0 %50
    %54 = vset.pattern.permute.xlu0 0
    %55 = vperm.xlu0 %54, %v40
    %v56 = vpop.permute.xlu0 %55
    %59 = vset.pattern.permute.xlu0 0
    %60 = vperm.xlu0 %59, %v41
    %v61 = vpop.permute.xlu0 %60
    %v64 = vlaneseq
    %v65 = vshrl.u32 %v64, 7
    %v66 = vsub.s32 0, %v65
    %v67 = vrot.slane %v42, %v66
    %v69 = vmul.f32 %v46, %v67
    %v70 = vmul.f32 %v51, %v67
    %v71 = vmul.f32 %v56, %v67
    %v72 = vmul.f32 %v61, %v67
    %73 = vset.pattern.permute.xlu0 1
    %74 = vperm.xlu0 %73, %v38
    %v75 = vpop.permute.xlu0 %74
    %77 = vset.pattern.permute.xlu0 1
    %78 = vperm.xlu0 %77, %v39
    %v79 = vpop.permute.xlu0 %78
    %81 = vset.pattern.permute.xlu0 1
    %82 = vperm.xlu0 %81, %v40
    %v83 = vpop.permute.xlu0 %82
    %85 = vset.pattern.permute.xlu0 1
    %86 = vperm.xlu0 %85, %v41
    %v87 = vpop.permute.xlu0 %86
    %v89 = vadd.f32 %v69, %v75
    %v90 = vadd.f32 %v70, %v79
    %v91 = vadd.f32 %v71, %v83
    %v92 = vadd.f32 %v72, %v87
    %v93 = vmax.f32 %v89, 0.0
    %v94 = vmax.f32 %v90, 0.0
    %v95 = vmax.f32 %v91, 0.0
    %v96 = vmax.f32 %v92, 0.0
    %97 = vset.pattern.permute.xlu0 2
    %98 = vperm.xlu0 %97, %v38
    %v99 = vpop.permute.xlu0 %98
    %101 = vset.pattern.permute.xlu0 2
    %102 = vperm.xlu0 %101, %v39
    %v103 = vpop.permute.xlu0 %102
    %105 = vset.pattern.permute.xlu0 2
    %106 = vperm.xlu0 %105, %v40
    %v107 = vpop.permute.xlu0 %106
    %109 = vset.pattern.permute.xlu0 2
    %110 = vperm.xlu0 %109, %v41
    %v111 = vpop.permute.xlu0 %110
    %v113 = vmul.f32 %v93, %v99
    %v114 = vmul.f32 %v94, %v103
    %v115 = vmul.f32 %v95, %v107
    %v116 = vmul.f32 %v96, %v111
    %v117 = vadd.f32 %v113, %v114
    %v118 = vadd.f32 %v117, %v115
    %v119 = vadd.f32 %v118, %v116
    %v120 = vrot.slane %v119, 4
    %v121 = vadd.f32 %v119, %v120
    %v122 = vrot.slane %v121, 2
    %v123 = vadd.f32 %v121, %v122
    %v124 = vrot.slane %v123, 1
    %v125 = vadd.f32 %v123, %v124
    %126 = vset.pattern.permute.xlu0 3
    %127 = vperm.xlu0 %126, %v38
    %v128 = vpop.permute.xlu0 %127
    %v130 = vadd.f32 %v125, %v128
    %131 = vst [vmem:[#allocation7] sm:$0x1] %v130
    // Predicated region
    $region18: #{net_forward_lanes.1} parent=1 // pred_check
      _
    $region19: #{net_forward_lanes.1} parent=1 // pred_check_branch
      %133 = sbr.rel (0) target = $region21
    $region20: #{net_forward_lanes.1} parent=1 // pred_region
      %s135 = ssub.s32 16, 16
      %136 = vsyncadd [#allocation4], %s135
      %s138 = sshll.u32 [#allocation7], 4
      %s139 = int_to_ptr.vmem [resolvable:$true] %s138
      %141 = dma.vmem_to_hbm [thread:$0]  %s139, 16, %s2, [#allocation4]
    $region21: #{net_forward_lanes.1} parent=1 // pred_fallthru
      _
    // Predicated region
    $region22: #{net_forward_lanes.1} parent=1 // pred_check
      _
    $region23: #{net_forward_lanes.1} parent=1 // pred_check_branch
      %143 = sbr.rel (0) target = $region25
    $region24: #{net_forward_lanes.1} parent=1 // pred_region
      %144 = dma.done [#allocation4], 16
    $region25: #{net_forward_lanes.1} parent=1 // pred_fallthru
      _
    %145 = vsyncpa [#allocation3], 1
    %146 = vsyncpa [#allocation6], 1
    %147 = vsyncpa [#allocation4], 1

</llo_original>
